<compile_context>
chip_gen: v7x
topology: tpu7x:2x2x1
jax: 0.10.0
libtpu: 0.0.40
codegen_flags: <defaults>
</compile_context>

<pallas_src>
import functools
import math

import jax
import jax.numpy as jnp
from jax.experimental import pallas as pl
from jax.experimental.pallas import tpu as pltpu


# ----------------------------------------------------------------------------
# Interpolation-matrix construction (PyTorch bilinear, align_corners=False).
# ----------------------------------------------------------------------------
def _make_interp_matrix(in_size: int, out_size: int, scale: float) -> jnp.ndarray:
    dst = jnp.arange(out_size, dtype=jnp.float32)
    src = (dst + 0.5) / scale - 0.5
    src = jnp.maximum(src, 0.0)                       # PyTorch clamps negatives
    lo = jnp.floor(src).astype(jnp.int32)
    lo = jnp.minimum(lo, in_size - 1)
    hi = jnp.minimum(lo + 1, in_size - 1)
    w_hi = src - lo.astype(jnp.float32)
    w_lo = 1.0 - w_hi
    rows = jnp.arange(out_size)
    mat = jnp.zeros((out_size, in_size), dtype=jnp.float32)
    mat = mat.at[rows, lo].add(w_lo)
    mat = mat.at[rows, hi].add(w_hi)
    return mat


# ----------------------------------------------------------------------------
# Static (Python-level) tiling decisions.
# ----------------------------------------------------------------------------
def _divisors(n: int):
    out = set()
    i = 1
    while i * i <= n:
        if n % i == 0:
            out.add(i)
            out.add(n // i)
        i += 1
    return sorted(out)


def _pick_fold(n_rows: int, width: int, lane_target: int = 128,
               max_lanes: int = 512) -> int:
    """Fold factor R: R consecutive rows form one lane-axis super-row (free view)."""
    if width >= lane_target:
        return 1
    divs = _divisors(n_rows)
    for r in divs:                      # prefer an exact multiple of 128 lanes
        if (r * width) % lane_target == 0 and r * width <= max_lanes:
            return r
    for r in divs:                      # else at least 128 lanes
        if r * width >= lane_target:
            return r
    return n_rows


def _padded_bytes(rows: int, cols: int, itemsize: int) -> int:
    # Rough VMEM (8, 128) tile-padding estimate.
    return (-(-rows // 8) * 8) * (-(-cols // 128) * 128) * itemsize


def _pick_h_subblock(tb, hpi, hr, r_fold, ri_fold, c_itemsize, sub_align,
                     cap_bytes) -> int:
    """Channel sub-block TBH for the kron height matrices (bounds the TB^2 blowup)."""
    def kron_bytes(t):
        return r_fold * _padded_bytes(t * hr, ri_fold * t * hpi, c_itemsize)

    divs = _divisors(tb)

    def ok(t, need_align, need_big):
        if kron_bytes(t) > cap_bytes:
            return False
        if need_align and ((t * hpi) % sub_align or (t * hr) % sub_align):
            return False
        if need_big and t * hr < 128:
            return False
        return True

    for need_align, need_big in ((True, True), (False, True),
                                 (True, False), (False, False)):
        cands = [t for t in divs if ok(t, need_align, need_big)]
        if cands:
            # Big enough M dim: take the smallest (least kron waste); otherwise
            # the largest sub-block that still fits the cap.
            return min(cands) if need_big else max(cands)
    return 1


def _block_vmem_bytes(tb, tbh, hpi, hr, w_in, w_out, r_fold, ri_fold,
                      x_itemsize, c_itemsize, o_itemsize) -> int:
    inb = 2 * _padded_bytes(tb * hpi, ri_fold * w_in, x_itemsize)     # double-buffered
    outb = 2 * _padded_bytes(tb * hr, r_fold * w_out, o_itemsize)     # double-buffered
    awb = _padded_bytes(ri_fold * w_in, ri_fold * w_out, c_itemsize)  # single-buffered
    ahb = r_fold * _padded_bytes(tbh * hr, ri_fold * tbh * hpi, c_itemsize)
    tmpb = _padded_bytes(tb * hpi, ri_fold * w_out, 4)                # f32 intermediate
    return inb + outb + awb + ahb + tmpb


def _pick_channels_per_block(nc, hpi, hr, w_in, w_out, r_fold, ri_fold,
                             x_itemsize, c_itemsize, o_itemsize, sub_align,
                             budget_bytes):
    kron_cap = max(2 << 20, budget_bytes // 8)

    def tbh_for(tb):
        return _pick_h_subblock(tb, hpi, hr, r_fold, ri_fold, c_itemsize,
                                sub_align, kron_cap)

    def fits(tb):
        return _block_vmem_bytes(tb, tbh_for(tb), hpi, hr, w_in, w_out, r_fold,
                                 ri_fold, x_itemsize, c_itemsize,
                                 o_itemsize) <= budget_bytes

    def layout_ok(tb):
        if tb == nc:                    # full-array block is always legal
            return True
        return (tb * hpi) % sub_align == 0 and (tb * hr) % sub_align == 0

    valid = [tb for tb in sorted(_divisors(nc), reverse=True)
             if layout_ok(tb) and fits(tb)]
    if not valid:
        # Even the smallest legal block exceeds the budget (huge spatial dims):
        # take the smallest legal one; the caller raises vmem_limit_bytes.
        legal = [tb for tb in sorted(_divisors(nc)) if layout_ok(tb)]
        tb = legal[0] if legal else nc
        return tb, tbh_for(tb)
    # Prefer enough grid steps for v7x (2 TCs x pipeline ramp), then at least
    # prefetch overlap, then the biggest fitting block.
    for min_steps in (4, 2):
        for tb in valid:
            if nc // tb >= min_steps:
                return tb, tbh_for(tb)
    tb = valid[0]
    return tb, tbh_for(tb)


def _vmem_capacity_bytes() -> int:
    try:
        return int(pltpu.get_tpu_info().vmem_capacity_bytes)
    except Exception:                   # noqa: BLE001 - conservative fallback
        return 64 * 1024 * 1024         # v7x-sized per-core VMEM


def _const_spec(block_shape, index_map):
    """BlockSpec for a constant operand: fetched once, single-buffered."""
    try:
        return pl.BlockSpec(block_shape, index_map, pipeline_mode=pl.Buffered(1))
    except Exception:                   # noqa: BLE001 - older API: plain spec
        return pl.BlockSpec(block_shape, index_map)


# ----------------------------------------------------------------------------
# Kernel: one block of TB channels per grid step.
# ----------------------------------------------------------------------------
def _interp_kernel(x_ref, aw_ref, ah_ref, o_ref, *,
                   n_chunks, rows_in, rows_out, r_fold, ri_fold, w_out):
    # x_ref : (TB*hpi, Ri*W_in)                    lane-folded input rows
    # aw_ref: (Ri*W_in, Ri*W_out)                  kron(I_Ri, A_W^T)
    # ah_ref: (R, TBH*hr, Ri*TBH*hpi)              per-phase kron height matrices
    # o_ref : (TB*hr, R*W_out)                     lane-folded output rows
    x = x_ref[...]
    if x.dtype != aw_ref.dtype:
        x = x.astype(aw_ref.dtype)

    # Width interpolation: one wide MXU matmul over the whole channel block.
    y = jnp.dot(x, aw_ref[...], preferred_element_type=jnp.float32)
    y = y.astype(aw_ref.dtype)

    # Height interpolation, TBH channels at a time (bounds the kron blowup).
    # Static unroll: n_chunks is kept small by construction, slices are static.
    for c in range(n_chunks):
        y_c = y[c * rows_in:(c + 1) * rows_in, :]
        if ri_fold > 1:
            # Un-fold the W-interp result: lane group gi holds input row Ri*j+gi.
            y_c = jnp.concatenate(
                [y_c[:, gi * w_out:(gi + 1) * w_out] for gi in range(ri_fold)],
                axis=0)
        # One matmul per output lane-group (phase); cast to the output dtype
        # *before* the lane concat to halve relayout traffic / f32 live range.
        pieces = [
            jnp.dot(ah_ref[r], y_c,
                    preferred_element_type=jnp.float32).astype(o_ref.dtype)
            for r in range(r_fold)
        ]
        blk = pieces[0] if r_fold == 1 else jnp.concatenate(pieces, axis=-1)
        o_ref[c * rows_out:(c + 1) * rows_out, :] = blk


# ----------------------------------------------------------------------------
# Wrapper.
# ----------------------------------------------------------------------------
@functools.partial(jax.jit, static_argnames=("scale_factor", "mode"))
def interpolate(x: jnp.ndarray, *, scale_factor: float = 2.0, mode: str = "bilinear"):
    """Pallas equivalent of Interpolate(mode, scale_factor)(x) for NCHW input."""
    if mode != "bilinear":
        # TODO(synk): only mode='bilinear' (align_corners=False) is implemented.
        raise NotImplementedError("only bilinear mode implemented")
    scale = float(scale_factor)

    n, c, h_in, w_in = x.shape
    h_out = int(math.floor(h_in * scale))
    w_out = int(math.floor(w_in * scale))
    nc = n * c

    # Compute dtype: bf16 operands stay bf16 (MXU-native, f32 accumulation).
    if x.dtype == jnp.bfloat16:
        cdtype, c_itemsize, sub_align = jnp.bfloat16, 2, 16
    else:
        cdtype, c_itemsize, sub_align = jnp.float32, 4, 8
    x_itemsize = x.dtype.itemsize

    # Lane folds (free NCHW views): output rows folded by R, input rows by Ri.
    r_fold = _pick_fold(h_out, w_out)
    ri_fold = _pick_fold(h_in, w_in)
    hr, hpi = h_out // r_fold, h_in // ri_fold

    # Generation-aware VMEM budget/limit (v5e/v6e: 128 MiB VMEM, v7x: 64 MiB).
    vmem_cap = _vmem_capacity_bytes()
    budget = max(16 << 20, int(vmem_cap * 0.40))
    vmem_limit = max(32 << 20, int(vmem_cap * 0.60))

    tb, tbh = _pick_channels_per_block(
        nc, hpi, hr, w_in, w_out, r_fold, ri_fold,
        x_itemsize, c_itemsize, x_itemsize, sub_align, budget)
    n_chunks = tb // tbh

    # Guard: if the smallest legal block still exceeds the limit, raise the
    # limit within the chip's VMEM instead of failing to compile.
    block_bytes = _block_vmem_bytes(tb, tbh, hpi, hr, w_in, w_out, r_fold,
                                    ri_fold, x_itemsize, c_itemsize, x_itemsize)
    if block_bytes + (4 << 20) > vmem_limit:
        vmem_limit = min(max(vmem_cap - (4 << 20), 32 << 20),
                         block_bytes + (8 << 20))

    # Interpolation matrices.
    a_h = _make_interp_matrix(h_in, h_out, scale)          # (H_out, H_in)
    a_w_t = _make_interp_matrix(w_in, w_out, scale).T      # (W_in, W_out)
    if ri_fold > 1:
        aw_big = jnp.kron(jnp.eye(ri_fold, dtype=jnp.float32), a_w_t)
    else:
        aw_big = a_w_t
    aw_big = aw_big.astype(cdtype)                         # (Ri*W_in, Ri*W_out)

    eye_tbh = jnp.eye(tbh, dtype=jnp.float32)
    ah_stack = jnp.stack([
        jnp.concatenate(
            [jnp.kron(eye_tbh, a_h[r::r_fold, gi::ri_fold])
             for gi in range(ri_fold)], axis=1)
        for r in range(r_fold)
    ]).astype(cdtype)                                      # (R, TBH*hr, Ri*TBH*hpi)

    # Free (view-only) reshapes: no HBM transposes anywhere.
    x2d = x.reshape(nc * hpi, ri_fold * w_in)
    out2d_shape = (nc * hr, r_fold * w_out)

    # Cost estimate including the kron zero-flops the MXU actually executes.
    flops = (2 * nc * hpi * (ri_fold * w_in) * (ri_fold * w_out)
             + 2 * (nc // tbh) * r_fold * (tbh * hr) * (ri_fold * tbh * hpi) * w_out)
    bytes_accessed = (nc * h_in * w_in * x_itemsize
                      + nc * h_out * w_out * x_itemsize
                      + (ri_fold * w_in) * (ri_fold * w_out) * c_itemsize
                      + r_fold * (tbh * hr) * (ri_fold * tbh * hpi) * c_itemsize)

    kernel = functools.partial(
        _interp_kernel, n_chunks=n_chunks, rows_in=tbh * hpi, rows_out=tbh * hr,
        r_fold=r_fold, ri_fold=ri_fold, w_out=w_out)

    out2d = pl.pallas_call(
        kernel,
        out_shape=jax.ShapeDtypeStruct(out2d_shape, x.dtype),
        grid_spec=pltpu.PrefetchScalarGridSpec(
            num_scalar_prefetch=0,
            grid=(nc // tb,),
            in_specs=[
                pl.BlockSpec((tb * hpi, ri_fold * w_in), lambda i: (i, 0)),
                _const_spec((ri_fold * w_in, ri_fold * w_out), lambda i: (0, 0)),
                _const_spec((r_fold, tbh * hr, ri_fold * tbh * hpi),
                            lambda i: (0, 0, 0)),
            ],
            out_specs=pl.BlockSpec((tb * hr, r_fold * w_out), lambda i: (i, 0)),
        ),
        compiler_params=pltpu.CompilerParams(
            dimension_semantics=("parallel",),
            vmem_limit_bytes=int(vmem_limit),
        ),
        cost_estimate=pl.CostEstimate(
            flops=int(flops), transcendentals=0,
            bytes_accessed=int(bytes_accessed)),
    )(x2d, aw_big, ah_stack)

    # Free view back to NCHW.
    return out2d.reshape(n, c, h_out, w_out)


if __name__ == "__main__":
    key = jax.random.PRNGKey(0)
    k1, k2 = jax.random.split(key)
    x = jax.random.normal(k1, (2, 4, 16, 16), dtype=jnp.float32)

    y = interpolate(x, scale_factor=2.0, mode="bilinear")
    jax.block_until_ready(y)
    assert y.shape == (2, 4, 32, 32), y.shape
    assert y.dtype == x.dtype

    # Reference: pure-JAX separable bilinear (same math, no Pallas).
    a_h = _make_interp_matrix(16, 32, 2.0)
    a_w = _make_interp_matrix(16, 32, 2.0)
    ref = jnp.einsum("oh,nchw,pw->ncop", a_h, x, a_w)
    assert jnp.allclose(y, ref, atol=1e-5, rtol=1e-5)

    # bf16 path: operands stay bf16 on the MXU (f32 accumulation).
    xb = x.astype(jnp.bfloat16)
    yb = interpolate(xb, scale_factor=2.0, mode="bilinear")
    jax.block_until_ready(yb)
    assert yb.dtype == jnp.bfloat16
    assert jnp.allclose(yb.astype(jnp.float32), ref, atol=5e-2, rtol=5e-2)

    # Wide-input path (W_in >= 128): no lane folding, single matmul per phase.
    x2 = jax.random.normal(k2, (1, 2, 32, 128), dtype=jnp.float32)
    y2 = interpolate(x2, scale_factor=2.0, mode="bilinear")
    jax.block_until_ready(y2)
    assert y2.shape == (1, 2, 64, 256), y2.shape
    a_h2 = _make_interp_matrix(32, 64, 2.0)
    a_w2 = _make_interp_matrix(128, 256, 2.0)
    ref2 = jnp.einsum("oh,nchw,pw->ncop", a_h2, x2, a_w2)
    assert jnp.allclose(y2, ref2, atol=1e-5, rtol=1e-5)

    print("KERNEL_OK")
</pallas_src>

<mosaic_0001>
module attributes {stable_mosaic.version = 11 : i64} {
  func.func private @main(%arg0: i32) attributes {dimension_semantics = [#tpu.dimension_semantics<core_parallel>], iteration_bounds = array<i64: 2>, tpu.core_type = #tpu.core_type<sc_scalar_subcore>, window_params = []} {
    return
  }
}

module attributes {stable_mosaic.version = 11 : i64} {
  func.func private @main(%arg0: i32) attributes {dimension_semantics = [#tpu.dimension_semantics<core_parallel>], iteration_bounds = array<i64: 2>, tpu.core_type = #tpu.core_type<sc_scalar_subcore>, window_params = []} {
    return
  }
}

module attributes {stable_mosaic.version = 11 : i64} {
  func.func @_interp_kernel(%arg0: i32, %arg1: memref<8x128xf32, #tpu.memory_space<vmem>>, %arg2: memref<128x256xf32, #tpu.memory_space<vmem>>, %arg3: memref<4x32x64xf32, #tpu.memory_space<vmem>>, %arg4: memref<32x128xf32, #tpu.memory_space<vmem>>) attributes {dimension_semantics = [#tpu.dimension_semantics<parallel>], iteration_bounds = array<i64: 2>, scalar_prefetch = 0 : i64, scratch_operands = 0 : i64, tpu.core_type = #tpu.core_type<tc>, window_params = [{transform_indices = @transform_0, window_bounds = array<i64: 8, 128>}, {pipeline_mode = #tpu.pipeline_mode<synchronous>, transform_indices = @transform_1, window_bounds = array<i64: 128, 256>}, {pipeline_mode = #tpu.pipeline_mode<synchronous>, transform_indices = @transform_2, window_bounds = array<i64: 4, 32, 64>}, {transform_indices = @transform_3, window_bounds = array<i64: 32, 128>}]} {
    %c0 = arith.constant 0 : index
    %c0_0 = arith.constant 0 : index
    %0 = vector.load %arg1[%c0, %c0_0] : memref<8x128xf32, #tpu.memory_space<vmem>>, vector<8x128xf32>
    %c0_1 = arith.constant 0 : index
    %c0_2 = arith.constant 0 : index
    %1 = vector.load %arg2[%c0_1, %c0_2] : memref<128x256xf32, #tpu.memory_space<vmem>>, vector<128x256xf32>
    %cst = arith.constant dense<0.000000e+00> : vector<8x256xf32>
    %2 = tpu.matmul %0, %1, %cst {dimension_numbers = #tpu.dot_dimension_numbers<[1], [0], [0], [1], [0, 0, 1, 1], [], []>} : vector<8x128xf32>, vector<128x256xf32>, vector<8x256xf32> -> vector<8x256xf32>
    %3 = vector.extract_strided_slice %2 {offsets = [0, 0], sizes = [8, 32], strides = [1, 1]} : vector<8x256xf32> to vector<8x32xf32>
    %4 = vector.extract_strided_slice %2 {offsets = [0, 32], sizes = [8, 32], strides = [1, 1]} : vector<8x256xf32> to vector<8x32xf32>
    %5 = vector.extract_strided_slice %2 {offsets = [0, 64], sizes = [8, 32], strides = [1, 1]} : vector<8x256xf32> to vector<8x32xf32>
    %6 = vector.extract_strided_slice %2 {offsets = [0, 96], sizes = [8, 32], strides = [1, 1]} : vector<8x256xf32> to vector<8x32xf32>
    %7 = vector.extract_strided_slice %2 {offsets = [0, 128], sizes = [8, 32], strides = [1, 1]} : vector<8x256xf32> to vector<8x32xf32>
    %8 = vector.extract_strided_slice %2 {offsets = [0, 160], sizes = [8, 32], strides = [1, 1]} : vector<8x256xf32> to vector<8x32xf32>
    %9 = vector.extract_strided_slice %2 {offsets = [0, 192], sizes = [8, 32], strides = [1, 1]} : vector<8x256xf32> to vector<8x32xf32>
    %10 = vector.extract_strided_slice %2 {offsets = [0, 224], sizes = [8, 32], strides = [1, 1]} : vector<8x256xf32> to vector<8x32xf32>
    %11 = tpu.concatenate %3, %4, %5, %6, %7, %8, %9, %10 in 0 : vector<8x32xf32>, vector<8x32xf32>, vector<8x32xf32>, vector<8x32xf32>, vector<8x32xf32>, vector<8x32xf32>, vector<8x32xf32>, vector<8x32xf32> -> vector<64x32xf32>
    %c0_3 = arith.constant 0 : index
    %c0_4 = arith.constant 0 : index
    %c0_5 = arith.constant 0 : index
    %12 = vector.load %arg3[%c0_3, %c0_4, %c0_5] : memref<4x32x64xf32, #tpu.memory_space<vmem>>, vector<1x32x64xf32>
    %13 = vector.shape_cast %12 : vector<1x32x64xf32> to vector<32x64xf32>
    %cst_6 = arith.constant dense<0.000000e+00> : vector<32x32xf32>
    %14 = tpu.matmul %13, %11, %cst_6 {dimension_numbers = #tpu.dot_dimension_numbers<[1], [0], [0], [1], [0, 0, 1, 1], [], []>} : vector<32x64xf32>, vector<64x32xf32>, vector<32x32xf32> -> vector<32x32xf32>
    %c1 = arith.constant 1 : index
    %c0_7 = arith.constant 0 : index
    %c0_8 = arith.constant 0 : index
    %15 = vector.load %arg3[%c1, %c0_7, %c0_8] : memref<4x32x64xf32, #tpu.memory_space<vmem>>, vector<1x32x64xf32>
    %16 = vector.shape_cast %15 : vector<1x32x64xf32> to vector<32x64xf32>
    %cst_9 = arith.constant dense<0.000000e+00> : vector<32x32xf32>
    %17 = tpu.matmul %16, %11, %cst_9 {dimension_numbers = #tpu.dot_dimension_numbers<[1], [0], [0], [1], [0, 0, 1, 1], [], []>} : vector<32x64xf32>, vector<64x32xf32>, vector<32x32xf32> -> vector<32x32xf32>
    %c2 = arith.constant 2 : index
    %c0_10 = arith.constant 0 : index
    %c0_11 = arith.constant 0 : index
    %18 = vector.load %arg3[%c2, %c0_10, %c0_11] : memref<4x32x64xf32, #tpu.memory_space<vmem>>, vector<1x32x64xf32>
    %19 = vector.shape_cast %18 : vector<1x32x64xf32> to vector<32x64xf32>
    %cst_12 = arith.constant dense<0.000000e+00> : vector<32x32xf32>
    %20 = tpu.matmul %19, %11, %cst_12 {dimension_numbers = #tpu.dot_dimension_numbers<[1], [0], [0], [1], [0, 0, 1, 1], [], []>} : vector<32x64xf32>, vector<64x32xf32>, vector<32x32xf32> -> vector<32x32xf32>
    %c3 = arith.constant 3 : index
    %c0_13 = arith.constant 0 : index
    %c0_14 = arith.constant 0 : index
    %21 = vector.load %arg3[%c3, %c0_13, %c0_14] : memref<4x32x64xf32, #tpu.memory_space<vmem>>, vector<1x32x64xf32>
    %22 = vector.shape_cast %21 : vector<1x32x64xf32> to vector<32x64xf32>
    %cst_15 = arith.constant dense<0.000000e+00> : vector<32x32xf32>
    %23 = tpu.matmul %22, %11, %cst_15 {dimension_numbers = #tpu.dot_dimension_numbers<[1], [0], [0], [1], [0, 0, 1, 1], [], []>} : vector<32x64xf32>, vector<64x32xf32>, vector<32x32xf32> -> vector<32x32xf32>
    %24 = tpu.concatenate %14, %17, %20, %23 in 1 : vector<32x32xf32>, vector<32x32xf32>, vector<32x32xf32>, vector<32x32xf32> -> vector<32x128xf32>
    %c0_16 = arith.constant 0 : index
    %c0_17 = arith.constant 0 : index
    %25 = vector.load %arg4[%c0_16, %c0_17] : memref<32x128xf32, #tpu.memory_space<vmem>>, vector<32x128xf32>
    tpu.vector_store %arg4[%c0_16, %c0_17], %24 {strides = array<i32>} : memref<32x128xf32, #tpu.memory_space<vmem>>, vector<32x128xf32>,
    return
  }
  func.func @transform_0(%arg0: i32) -> (i32, i32) {
    %c0_i32 = arith.constant 0 : i32
    %c0_i32_0 = arith.constant 0 : i32
    return %arg0, %c0_i32 : i32, i32
  }
  func.func @transform_1(%arg0: i32) -> (i32, i32) {
    %c0_i32 = arith.constant 0 : i32
    %c0_i32_0 = arith.constant 0 : i32
    %c0_i32_1 = arith.constant 0 : i32
    return %c0_i32, %c0_i32_0 : i32, i32
  }
  func.func @transform_2(%arg0: i32) -> (i32, i32, i32) {
    %c0_i32 = arith.constant 0 : i32
    %c0_i32_0 = arith.constant 0 : i32
    %c0_i32_1 = arith.constant 0 : i32
    %c0_i32_2 = arith.constant 0 : i32
    return %c0_i32, %c0_i32_0, %c0_i32_1 : i32, i32, i32
  }
  func.func @transform_3(%arg0: i32) -> (i32, i32) {
    %c0_i32 = arith.constant 0 : i32
    %c0_i32_0 = arith.constant 0 : i32
    return %arg0, %c0_i32 : i32, i32
  }
}

</mosaic_0001>

<llo_original>
// kernel: interpolate.1
$region0: #{interpolate.1}
  #allocation0 [shape = 'u32[]', space=smem, size = 0x4, offset = 0x4, fixed_abs, tag = 'smem constant byte address 0x4 - core index']
  #allocation1 [shape = 'u32[144,128]{1,0:T(1,128)}', space=vmem, size = 0x12000, scoped, tag = 'internal scratch']
  %s0 = inlined_call_operand.vmem [shape: f32[16,128], index: 0, kind: input, shape index: {}]
  %s1 = inlined_call_operand.vmem [shape: f32[128,256], index: 1, kind: input, shape index: {}]
  %s2 = inlined_call_operand.vmem [shape: f32[4,32,64], index: 2, kind: input, shape index: {}]
  %s3 = inlined_call_operand.vmem [shape: f32[64,128], index: 3, kind: output, shape index: {}]
  %s4 = sld [smem:[#allocation0]]
  $region45: #{interpolate.1} parent=0
    _
  %s6 = ssub.s32 1, %s4
  %s7 = scalar_select 0, %s6, %s4
  loop: start=0, step=1, limit=4
  $region2: #{interpolate.1} parent=0 // loop_pre_header
    _
  $region3: #{interpolate.1} parent=0 // loop_header
    %s9 = sphi 0, %s13
    %p10 = scmp.ge.s32.totalorder %s9, 4
    %s19 = sphi 0, %s21
    %s22 = sphi 0, %s19
    %s23 = sphi 0, %s22
    %s39 = sphi 0, %s23
    %s43 = sphi 0, %s43
    %s45 = sphi 0, %s43
    %s46 = sphi 0, %s45
    %s60 = sphi 0, %s46
    %s64 = sphi 0, %s64
    %s66 = sphi 0, %s64
    %s67 = sphi 0, %s66
    %s81 = sphi 0, %s67
    %s87 = sphi 0, %s89
    %s90 = sphi 0, %s87
    %s91 = sphi 0, %s90
    %s107 = sphi 0, %s91
  $region4: #{interpolate.1} parent=0 // loop_header_branch
    %12 = sbr.rel (%p10) target = $region8
  $region5: #{interpolate.1} parent=0 // loop_body
    %s14 = ssub.s32 %s9, 1
    %s15 = ssub.s32 %s9, 2
    %s16 = sadd.s32 %s9, 1
    %s17 = ssub.s32 %s9, %s16
    %p18 = scmp.eq.s32.totalorder %s17, 0
    %s20 = sadd.s32 %s19, 1
    %s21 = scalar_select %p18, %s19, %s20
    %p24 = pneg %p18
    %p25 = scmp.eq.s32.totalorder %s9, 1
    %p26 = por %p24, %p25
    %p27 = scmp.ne.s32.totalorder %s19, %s22
    %p28 = scmp.eq.s32.totalorder %s9, 0
    %p29 = por %p27, %p28
    %p30 = scmp.ne.s32.totalorder %s19, %s22
    %p31 = scmp.eq.s32.totalorder %s14, 1
    %p32 = por %p30, %p31
    %p33 = scmp.ne.s32.totalorder %s22, %s23
    %p34 = scmp.eq.s32.totalorder %s14, 0
    %p35 = por %p33, %p34
    %p36 = scmp.ne.s32.totalorder %s22, %s23
    %p37 = scmp.eq.s32.totalorder %s15, 1
    %p38 = por %p36, %p37
    %p40 = scmp.ne.s32.totalorder %s23, %s39
    %p41 = scmp.eq.s32.totalorder %s15, 0
    %p42 = por %p40, %p41
    %s44 = sadd.s32 %s43, 1
    %p47 = scmp.eq.s32.totalorder %s9, 1
    %p48 = scmp.ne.s32.totalorder %s43, %s45
    %p49 = scmp.eq.s32.totalorder %s9, 0
    %p50 = por %p48, %p49
    %p51 = scmp.ne.s32.totalorder %s43, %s45
    %p52 = scmp.eq.s32.totalorder %s14, 1
    %p53 = por %p51, %p52
    %p54 = scmp.ne.s32.totalorder %s45, %s46
    %p55 = scmp.eq.s32.totalorder %s14, 0
    %p56 = por %p54, %p55
    %p57 = scmp.ne.s32.totalorder %s45, %s46
    %p58 = scmp.eq.s32.totalorder %s15, 1
    %p59 = por %p57, %p58
    %p61 = scmp.ne.s32.totalorder %s46, %s60
    %p62 = scmp.eq.s32.totalorder %s15, 0
    %p63 = por %p61, %p62
    %s65 = sadd.s32 %s64, 1
    %p68 = scmp.eq.s32.totalorder %s9, 1
    %p69 = scmp.ne.s32.totalorder %s64, %s66
    %p70 = scmp.eq.s32.totalorder %s9, 0
    %p71 = por %p69, %p70
    %p72 = scmp.ne.s32.totalorder %s64, %s66
    %p73 = scmp.eq.s32.totalorder %s14, 1
    %p74 = por %p72, %p73
    %p75 = scmp.ne.s32.totalorder %s66, %s67
    %p76 = scmp.eq.s32.totalorder %s14, 0
    %p77 = por %p75, %p76
    %p78 = scmp.ne.s32.totalorder %s66, %s67
    %p79 = scmp.eq.s32.totalorder %s15, 1
    %p80 = por %p78, %p79
    %p82 = scmp.ne.s32.totalorder %s67, %s81
    %p83 = scmp.eq.s32.totalorder %s15, 0
    %p84 = por %p82, %p83
    %s85 = ssub.s32 %s9, %s16
    %p86 = scmp.eq.s32.totalorder %s85, 0
    %s88 = sadd.s32 %s87, 1
    %s89 = scalar_select %p86, %s87, %s88
    %p92 = pneg %p86
    %p93 = scmp.eq.s32.totalorder %s9, 1
    %p94 = por %p92, %p93
    %p95 = scmp.ne.s32.totalorder %s87, %s90
    %p96 = scmp.eq.s32.totalorder %s9, 0
    %p97 = por %p95, %p96
    %p98 = scmp.ne.s32.totalorder %s87, %s90
    %p99 = scmp.eq.s32.totalorder %s14, 1
    %p100 = por %p98, %p99
    %p101 = scmp.ne.s32.totalorder %s90, %s91
    %p102 = scmp.eq.s32.totalorder %s14, 0
    %p103 = por %p101, %p102
    %p104 = scmp.ne.s32.totalorder %s90, %s91
    %p105 = scmp.eq.s32.totalorder %s15, 1
    %p106 = por %p104, %p105
    %p108 = scmp.ne.s32.totalorder %s91, %s107
    %p109 = scmp.eq.s32.totalorder %s15, 0
    %p110 = por %p108, %p109
    %p111 = scmp.le.s32.totalorder 1, %s9
    %p112 = scmp.lt.s32.totalorder %s9, 3
    %p113 = pnand %p111, %p112
    %p114 = pneg %p113
    // Predicated region
    $region9: #{interpolate.1} parent=5 // pred_check
      _
    $region10: #{interpolate.1} parent=5 // pred_check_branch
      %116 = sbr.rel (%p113) target = $region12
    $region11: #{interpolate.1} parent=5 // pred_region
      %s117 = ssub.s32 %s9, 1
      // Predicated region
      $region13: #{interpolate.1} parent=11 // pred_check
        %p118 = pneg %p56
      $region14: #{interpolate.1} parent=11 // pred_check_branch
        %120 = sbr.rel (%p118) target = $region16
      $region15: #{interpolate.1} parent=11 // pred_region
        _
      $region16: #{interpolate.1} parent=11 // pred_fallthru
        _
      // Predicated region
      $region17: #{interpolate.1} parent=11 // pred_check
        %p121 = pneg %p77
      $region18: #{interpolate.1} parent=11 // pred_check_branch
        %123 = sbr.rel (%p121) target = $region20
      $region19: #{interpolate.1} parent=11 // pred_region
        _
      $region20: #{interpolate.1} parent=11 // pred_fallthru
        _
    $region12: #{interpolate.1} parent=5 // pred_fallthru
      _
    %p124 = scmp.lt.s32.totalorder %s9, 2
    // Predicated region
    $region21: #{interpolate.1} parent=5 // pred_check
      %p125 = pneg %p124
    $region22: #{interpolate.1} parent=5 // pred_check_branch
      %127 = sbr.rel (%p125) target = $region24
    $region23: #{interpolate.1} parent=5 // pred_region
      // Predicated region
      $region25: #{interpolate.1} parent=23 // pred_check
        %p128 = pneg %p29
      $region26: #{interpolate.1} parent=23 // pred_check_branch
        %130 = sbr.rel (%p128) target = $region28
      $region27: #{interpolate.1} parent=23 // pred_region
        %p131 = scmp.lt.s32.totalorder %s9, 1
        %s132 = scalar_select %p131, %s9, 1
        %s133 = smul.addr %s132, 8
        %s134 = scalar_lea.vmem %s0, %s133
      $region28: #{interpolate.1} parent=23 // pred_fallthru
        _
    $region24: #{interpolate.1} parent=5 // pred_fallthru
      _
    %p135 = scmp.le.s32.totalorder 1, %s9
    %p136 = scmp.lt.s32.totalorder %s9, 3
    %p137 = pnand %p135, %p136
    %p138 = pneg %p137
    // Predicated region
    $region29: #{interpolate.1} parent=5 // pred_check
      _
    $region30: #{interpolate.1} parent=5 // pred_check_branch
      %140 = sbr.rel (%p137) target = $region32
    $region31: #{interpolate.1} parent=5 // pred_region
      %s141 = ssub.s32 %s9, 1
      %p142 = scmp.lt.s32.totalorder %s14, 1
      %s143 = scalar_select %p142, %s14, 1
      %s144 = smul.addr %s143, 8
      %s145 = scalar_lea.vmem %s0, %s144
      %p146 = pneg %p35
      %p147 = pneg %p32
      %p148 = pneg %p56
      %p149 = pneg %p53
      %p150 = pneg %p77
      %p151 = pneg %p74
      %p152 = pneg %p103
      %p153 = pneg %p100
      %s154 = smul.u32 4, %s14
      %p155 = scmp.lt.s32.totalorder %s154, 7
      %s156 = scalar_select %p155, %s154, 7
      %s157 = smul.addr %s156, 8
      %s158 = scalar_lea.vmem %s3, %s157
      %p159 = scmp.lt.s32.totalorder %s14, 1
      %s160 = scalar_select %p159, %s14, 1
      %s161 = smul.addr %s160, 8
      %s162 = scalar_lea.vmem %s0, %s161
      %s163 = smul.u32 4, %s14
      %p164 = scmp.lt.s32.totalorder %s163, 7
      %s165 = scalar_select %p164, %s163, 7
      %s166 = smul.addr %s165, 8
      %s167 = scalar_lea.vmem %s3, %s166
      %s168 = smul.u32 4, %s14
      %v169 = vld [vmem:[%s162] sm:$0xff]
      %v170 = vld [vmem:[%s1] sm:$0xff]
      %v171 = vld [vmem:[%s1 + $0x8] sm:$0xff]
      %v172 = vld [vmem:[%s1 + $0x10] sm:$0xff]
      %v173 = vld [vmem:[%s1 + $0x18] sm:$0xff]
      %v174 = vld [vmem:[%s1 + $0x20] sm:$0xff]
      %v175 = vld [vmem:[%s1 + $0x28] sm:$0xff]
      %v176 = vld [vmem:[%s1 + $0x30] sm:$0xff]
      %v177 = vld [vmem:[%s1 + $0x38] sm:$0xff]
      %v178 = vld [vmem:[%s1 + $0x40] sm:$0xff]
      %v179 = vld [vmem:[%s1 + $0x48] sm:$0xff]
      %v180 = vld [vmem:[%s1 + $0x50] sm:$0xff]
      %v181 = vld [vmem:[%s1 + $0x58] sm:$0xff]
      %v182 = vld [vmem:[%s1 + $0x60] sm:$0xff]
      %v183 = vld [vmem:[%s1 + $0x68] sm:$0xff]
      %v184 = vld [vmem:[%s1 + $0x70] sm:$0xff]
      %v185 = vld [vmem:[%s1 + $0x78] sm:$0xff]
      %v186 = vld [vmem:[%s1 + $0x80] sm:$0xff]
      %v187 = vld [vmem:[%s1 + $0x88] sm:$0xff]
      %v188 = vld [vmem:[%s1 + $0x90] sm:$0xff]
      %v189 = vld [vmem:[%s1 + $0x98] sm:$0xff]
      %v190 = vld [vmem:[%s1 + $0xa0] sm:$0xff]
      %v191 = vld [vmem:[%s1 + $0xa8] sm:$0xff]
      %v192 = vld [vmem:[%s1 + $0xb0] sm:$0xff]
      %v193 = vld [vmem:[%s1 + $0xb8] sm:$0xff]
      %v194 = vld [vmem:[%s1 + $0xc0] sm:$0xff]
      %v195 = vld [vmem:[%s1 + $0xc8] sm:$0xff]
      %v196 = vld [vmem:[%s1 + $0xd0] sm:$0xff]
      %v197 = vld [vmem:[%s1 + $0xd8] sm:$0xff]
      %v198 = vld [vmem:[%s1 + $0xe0] sm:$0xff]
      %v199 = vld [vmem:[%s1 + $0xe8] sm:$0xff]
      %v200 = vld [vmem:[%s1 + $0xf0] sm:$0xff]
      %v201 = vld [vmem:[%s1 + $0xf8] sm:$0xff]
      %202 = vmatprep.subr.mxu0 %v171
      %203 = vmatpush1.msra.mxu0 %v170
      %204 = vmatprep.subr.mxu0 %v173
      %205 = vmatpush1.msra.mxu0 %v172
      %206 = vmatprep.subr.mxu0 %v175
      %207 = vmatpush1.msra.mxu0 %v174
      %208 = vmatprep.subr.mxu0 %v177
      %209 = vmatpush1.msra.mxu0 %v176
      %210 = vmatprep.subr.mxu0 %v179
      %211 = vmatpush1.msra.mxu0 %v178
      %212 = vmatprep.subr.mxu0 %v181
      %213 = vmatpush1.msra.mxu0 %v180
      %214 = vmatprep.subr.mxu0 %v183
      %215 = vmatpush1.msra.mxu0 %v182
      %216 = vmatprep.subr.mxu0 %v185
      %217 = vmatpush1.msra.mxu0 %v184
      %218 = vmatprep.subr.mxu0 %v187
      %219 = vmatpush1.msra.mxu0 %v186
      %220 = vmatprep.subr.mxu0 %v189
      %221 = vmatpush1.msra.mxu0 %v188
      %222 = vmatprep.subr.mxu0 %v191
      %223 = vmatpush1.msra.mxu0 %v190
      %224 = vmatprep.subr.mxu0 %v193
      %225 = vmatpush1.msra.mxu0 %v192
      %226 = vmatprep.subr.mxu0 %v195
      %227 = vmatpush1.msra.mxu0 %v194
      %228 = vmatprep.subr.mxu0 %v197
      %229 = vmatpush1.msra.mxu0 %v196
      %230 = vmatprep.subr.mxu0 %v199
      %231 = vmatpush1.msra.mxu0 %v198
      %232 = vmatprep.subr.mxu0 %v201
      %233 = vmatpush1.msra.mxu0 %v200
      %234 = vmatprep.subr.mxu0 0.0
      %235 = vmatpush1.msra.mxu0 0.0
      %236 = vmatprep.subr.mxu0 0.0
      %237 = vmatpush1.msra.mxu0 0.0
      %238 = vmatprep.subr.mxu0 0.0
      %239 = vmatpush1.msra.mxu0 0.0
      %240 = vmatprep.subr.mxu0 0.0
      %241 = vmatpush1.msra.mxu0 0.0
      %242 = vmatprep.subr.mxu0 0.0
      %243 = vmatpush1.msra.mxu0 0.0
      %244 = vmatprep.subr.mxu0 0.0
      %245 = vmatpush1.msra.mxu0 0.0
      %246 = vmatprep.subr.mxu0 0.0
      %247 = vmatpush1.msra.mxu0 0.0
      %248 = vmatprep.subr.mxu0 0.0
      %249 = vmatpush1.msra.mxu0 0.0
      %250 = vmatprep.subr.mxu0 0.0
      %251 = vmatpush1.msra.mxu0 0.0
      %252 = vmatprep.subr.mxu0 0.0
      %253 = vmatpush1.msra.mxu0 0.0
      %254 = vmatprep.subr.mxu0 0.0
      %255 = vmatpush1.msra.mxu0 0.0
      %256 = vmatprep.subr.mxu0 0.0
      %257 = vmatpush1.msra.mxu0 0.0
      %258 = vmatprep.subr.mxu0 0.0
      %259 = vmatpush1.msra.mxu0 0.0
      %260 = vmatprep.subr.mxu0 0.0
      %261 = vmatpush1.msra.mxu0 0.0
      %262 = vmatprep.subr.mxu0 0.0
      %263 = vmatpush1.msra.mxu0 0.0
      %264 = vmatprep.subr.mxu0 0.0
      %265 = vmatpush1.msra.mxu0 0.0
      %266 = vmatprep.mubr.f32.mxu0 0.0
      %267 = vmatmul.mubr.f32.gmra.mrb[0].mxu0 %v169
      %v268 = vpop.f32.mrb[0].mxu0
      %v269 = vadd.f32 0.0, %v268
      %v270 = vpop.f32.mrb[0].mxu0
      %v271 = vadd.f32 0.0, %v270
      %272 = vdwg.mxu0
      %274 = vrot.lane.b32.xlu0 %v269, 96
      %v275 = vpop.permute.xlu0 %274
      %277 = vrot.lane.b32.xlu0 %v269, 64
      %v278 = vpop.permute.xlu0 %277
      %280 = vrot.lane.b32.xlu0 %v269, 32
      %v281 = vpop.permute.xlu0 %280
      %284 = vrot.lane.b32.xlu0 %v271, 96
      %v285 = vpop.permute.xlu0 %284
      %287 = vrot.lane.b32.xlu0 %v271, 64
      %v288 = vpop.permute.xlu0 %287
      %290 = vrot.lane.b32.xlu0 %v271, 32
      %v291 = vpop.permute.xlu0 %290
      %v293 = vld [vmem:[%s2] sm:$0xff]
      %v294 = vld [vmem:[%s2 + $0x8] sm:$0xff]
      %v295 = vld [vmem:[%s2 + $0x10] sm:$0xff]
      %v296 = vld [vmem:[%s2 + $0x18] sm:$0xff]
      %vm297 = vcmask 523264
      %v299 = vsel %vm297, %v293, 0
      %v302 = vsel %vm297, %v294, 0
      %v305 = vsel %vm297, %v295, 0
      %v308 = vsel %vm297, %v296, 0
      %310 = vmatprep.subr.mxu0 0.0
      %311 = vmatpush1.msra.mxu0 %v269
      %312 = vmatprep.subr.mxu0 0.0
      %313 = vmatpush1.msra.mxu0 %v275
      %314 = vmatprep.subr.mxu0 0.0
      %315 = vmatpush1.msra.mxu0 %v278
      %316 = vmatprep.subr.mxu0 0.0
      %317 = vmatpush1.msra.mxu0 %v281
      %318 = vmatprep.subr.mxu0 0.0
      %319 = vmatpush1.msra.mxu0 %v271
      %320 = vmatprep.subr.mxu0 0.0
      %321 = vmatpush1.msra.mxu0 %v285
      %322 = vmatprep.subr.mxu0 0.0
      %323 = vmatpush1.msra.mxu0 %v288
      %324 = vmatprep.subr.mxu0 0.0
      %325 = vmatpush1.msra.mxu0 %v291
      %326 = vmatprep.subr.mxu0 0.0
      %327 = vmatpush1.msra.mxu0 0.0
      %328 = vmatprep.subr.mxu0 0.0
      %329 = vmatpush1.msra.mxu0 0.0
      %330 = vmatprep.subr.mxu0 0.0
      %331 = vmatpush1.msra.mxu0 0.0
      %332 = vmatprep.subr.mxu0 0.0
      %333 = vmatpush1.msra.mxu0 0.0
      %334 = vmatprep.subr.mxu0 0.0
      %335 = vmatpush1.msra.mxu0 0.0
      %336 = vmatprep.subr.mxu0 0.0
      %337 = vmatpush1.msra.mxu0 0.0
      %338 = vmatprep.subr.mxu0 0.0
      %339 = vmatpush1.msra.mxu0 0.0
      %340 = vmatprep.subr.mxu0 0.0
      %341 = vmatpush1.msra.mxu0 0.0
      %342 = vmatprep.subr.mxu0 0.0
      %343 = vmatpush1.msra.mxu0 0.0
      %344 = vmatprep.subr.mxu0 0.0
      %345 = vmatpush1.msra.mxu0 0.0
      %346 = vmatprep.subr.mxu0 0.0
      %347 = vmatpush1.msra.mxu0 0.0
      %348 = vmatprep.subr.mxu0 0.0
      %349 = vmatpush1.msra.mxu0 0.0
      %350 = vmatprep.subr.mxu0 0.0
      %351 = vmatpush1.msra.mxu0 0.0
      %352 = vmatprep.subr.mxu0 0.0
      %353 = vmatpush1.msra.mxu0 0.0
      %354 = vmatprep.subr.mxu0 0.0
      %355 = vmatpush1.msra.mxu0 0.0
      %356 = vmatprep.subr.mxu0 0.0
      %357 = vmatpush1.msra.mxu0 0.0
      %358 = vmatprep.subr.mxu0 0.0
      %359 = vmatpush1.msra.mxu0 0.0
      %360 = vmatprep.subr.mxu0 0.0
      %361 = vmatpush1.msra.mxu0 0.0
      %362 = vmatprep.subr.mxu0 0.0
      %363 = vmatpush1.msra.mxu0 0.0
      %364 = vmatprep.subr.mxu0 0.0
      %365 = vmatpush1.msra.mxu0 0.0
      %366 = vmatprep.subr.mxu0 0.0
      %367 = vmatpush1.msra.mxu0 0.0
      %368 = vmatprep.subr.mxu0 0.0
      %369 = vmatpush1.msra.mxu0 0.0
      %370 = vmatprep.subr.mxu0 0.0
      %371 = vmatpush1.msra.mxu0 0.0
      %372 = vmatprep.subr.mxu0 0.0
      %373 = vmatpush1.msra.mxu0 0.0
      %374 = vmatprep.mubr.f32.mxu0 0.0
      %375 = vmatmul.mubr.f32.gmra.mrb[0].mxu0 %v299
      %v376 = vpop.f32.mrb[0].mxu0
      %v377 = vadd.f32 0.0, %v376
      %v378 = vpop.f32.mrb[0].mxu0
      %379 = vmatprep.mubr.f32.mxu0 0.0
      %380 = vmatmul.mubr.f32.gmra.mrb[0].mxu0 %v302
      %v381 = vpop.f32.mrb[0].mxu0
      %v382 = vadd.f32 0.0, %v381
      %v383 = vpop.f32.mrb[0].mxu0
      %384 = vmatprep.mubr.f32.mxu0 0.0
      %385 = vmatmul.mubr.f32.gmra.mrb[0].mxu0 %v305
      %v386 = vpop.f32.mrb[0].mxu0
      %v387 = vadd.f32 0.0, %v386
      %v388 = vpop.f32.mrb[0].mxu0
      %389 = vmatprep.mubr.f32.mxu0 0.0
      %390 = vmatmul.mubr.f32.gmra.mrb[0].mxu0 %v308
      %v391 = vpop.f32.mrb[0].mxu0
      %v392 = vadd.f32 0.0, %v391
      %v393 = vpop.f32.mrb[0].mxu0
      %394 = vdwg.mxu0
      %s395 = scalar_lea.vmem %s2, 32
      %v396 = vld [vmem:[%s395] sm:$0xff]
      %v397 = vld [vmem:[%s395 + $0x8] sm:$0xff]
      %v398 = vld [vmem:[%s395 + $0x10] sm:$0xff]
      %v399 = vld [vmem:[%s395 + $0x18] sm:$0xff]
      %v401 = vsel %vm297, %v396, 0
      %v404 = vsel %vm297, %v397, 0
      %v407 = vsel %vm297, %v398, 0
      %v410 = vsel %vm297, %v399, 0
      %412 = vmatprep.subr.mxu0 0.0
      %413 = vmatpush1.msra.mxu0 %v269
      %414 = vmatprep.subr.mxu0 0.0
      %415 = vmatpush1.msra.mxu0 %v275
      %416 = vmatprep.subr.mxu0 0.0
      %417 = vmatpush1.msra.mxu0 %v278
      %418 = vmatprep.subr.mxu0 0.0
      %419 = vmatpush1.msra.mxu0 %v281
      %420 = vmatprep.subr.mxu0 0.0
      %421 = vmatpush1.msra.mxu0 %v271
      %422 = vmatprep.subr.mxu0 0.0
      %423 = vmatpush1.msra.mxu0 %v285
      %424 = vmatprep.subr.mxu0 0.0
      %425 = vmatpush1.msra.mxu0 %v288
      %426 = vmatprep.subr.mxu0 0.0
      %427 = vmatpush1.msra.mxu0 %v291
      %428 = vmatprep.subr.mxu0 0.0
      %429 = vmatpush1.msra.mxu0 0.0
      %430 = vmatprep.subr.mxu0 0.0
      %431 = vmatpush1.msra.mxu0 0.0
      %432 = vmatprep.subr.mxu0 0.0
      %433 = vmatpush1.msra.mxu0 0.0
      %434 = vmatprep.subr.mxu0 0.0
      %435 = vmatpush1.msra.mxu0 0.0
      %436 = vmatprep.subr.mxu0 0.0
      %437 = vmatpush1.msra.mxu0 0.0
      %438 = vmatprep.subr.mxu0 0.0
      %439 = vmatpush1.msra.mxu0 0.0
      %440 = vmatprep.subr.mxu0 0.0
      %441 = vmatpush1.msra.mxu0 0.0
      %442 = vmatprep.subr.mxu0 0.0
      %443 = vmatpush1.msra.mxu0 0.0
      %444 = vmatprep.subr.mxu0 0.0
      %445 = vmatpush1.msra.mxu0 0.0
      %446 = vmatprep.subr.mxu0 0.0
      %447 = vmatpush1.msra.mxu0 0.0
      %448 = vmatprep.subr.mxu0 0.0
      %449 = vmatpush1.msra.mxu0 0.0
      %450 = vmatprep.subr.mxu0 0.0
      %451 = vmatpush1.msra.mxu0 0.0
      %452 = vmatprep.subr.mxu0 0.0
      %453 = vmatpush1.msra.mxu0 0.0
      %454 = vmatprep.subr.mxu0 0.0
      %455 = vmatpush1.msra.mxu0 0.0
      %456 = vmatprep.subr.mxu0 0.0
      %457 = vmatpush1.msra.mxu0 0.0
      %458 = vmatprep.subr.mxu0 0.0
      %459 = vmatpush1.msra.mxu0 0.0
      %460 = vmatprep.subr.mxu0 0.0
      %461 = vmatpush1.msra.mxu0 0.0
      %462 = vmatprep.subr.mxu0 0.0
      %463 = vmatpush1.msra.mxu0 0.0
      %464 = vmatprep.subr.mxu0 0.0
      %465 = vmatpush1.msra.mxu0 0.0
      %466 = vmatprep.subr.mxu0 0.0
      %467 = vmatpush1.msra.mxu0 0.0
      %468 = vmatprep.subr.mxu0 0.0
      %469 = vmatpush1.msra.mxu0 0.0
      %470 = vmatprep.subr.mxu0 0.0
      %471 = vmatpush1.msra.mxu0 0.0
      %472 = vmatprep.subr.mxu0 0.0
      %473 = vmatpush1.msra.mxu0 0.0
      %474 = vmatprep.subr.mxu0 0.0
      %475 = vmatpush1.msra.mxu0 0.0
      %476 = vmatprep.mubr.f32.mxu0 0.0
      %477 = vmatmul.mubr.f32.gmra.mrb[0].mxu0 %v401
      %v478 = vpop.f32.mrb[0].mxu0
      %v479 = vadd.f32 0.0, %v478
      %v480 = vpop.f32.mrb[0].mxu0
      %481 = vmatprep.mubr.f32.mxu0 0.0
      %482 = vmatmul.mubr.f32.gmra.mrb[0].mxu0 %v404
      %v483 = vpop.f32.mrb[0].mxu0
      %v484 = vadd.f32 0.0, %v483
      %v485 = vpop.f32.mrb[0].mxu0
      %486 = vmatprep.mubr.f32.mxu0 0.0
      %487 = vmatmul.mubr.f32.gmra.mrb[0].mxu0 %v407
      %v488 = vpop.f32.mrb[0].mxu0
      %v489 = vadd.f32 0.0, %v488
      %v490 = vpop.f32.mrb[0].mxu0
      %491 = vmatprep.mubr.f32.mxu0 0.0
      %492 = vmatmul.mubr.f32.gmra.mrb[0].mxu0 %v410
      %v493 = vpop.f32.mrb[0].mxu0
      %v494 = vadd.f32 0.0, %v493
      %v495 = vpop.f32.mrb[0].mxu0
      %496 = vdwg.mxu0
      %s497 = scalar_lea.vmem %s2, 64
      %v498 = vld [vmem:[%s497] sm:$0xff]
      %v499 = vld [vmem:[%s497 + $0x8] sm:$0xff]
      %v500 = vld [vmem:[%s497 + $0x10] sm:$0xff]
      %v501 = vld [vmem:[%s497 + $0x18] sm:$0xff]
      %v503 = vsel %vm297, %v498, 0
      %v506 = vsel %vm297, %v499, 0
      %v509 = vsel %vm297, %v500, 0
      %v512 = vsel %vm297, %v501, 0
      %514 = vmatprep.subr.mxu0 0.0
      %515 = vmatpush1.msra.mxu0 %v269
      %516 = vmatprep.subr.mxu0 0.0
      %517 = vmatpush1.msra.mxu0 %v275
      %518 = vmatprep.subr.mxu0 0.0
      %519 = vmatpush1.msra.mxu0 %v278
      %520 = vmatprep.subr.mxu0 0.0
      %521 = vmatpush1.msra.mxu0 %v281
      %522 = vmatprep.subr.mxu0 0.0
      %523 = vmatpush1.msra.mxu0 %v271
      %524 = vmatprep.subr.mxu0 0.0
      %525 = vmatpush1.msra.mxu0 %v285
      %526 = vmatprep.subr.mxu0 0.0
      %527 = vmatpush1.msra.mxu0 %v288
      %528 = vmatprep.subr.mxu0 0.0
      %529 = vmatpush1.msra.mxu0 %v291
      %530 = vmatprep.subr.mxu0 0.0
      %531 = vmatpush1.msra.mxu0 0.0
      %532 = vmatprep.subr.mxu0 0.0
      %533 = vmatpush1.msra.mxu0 0.0
      %534 = vmatprep.subr.mxu0 0.0
      %535 = vmatpush1.msra.mxu0 0.0
      %536 = vmatprep.subr.mxu0 0.0
      %537 = vmatpush1.msra.mxu0 0.0
      %538 = vmatprep.subr.mxu0 0.0
      %539 = vmatpush1.msra.mxu0 0.0
      %540 = vmatprep.subr.mxu0 0.0
      %541 = vmatpush1.msra.mxu0 0.0
      %542 = vmatprep.subr.mxu0 0.0
      %543 = vmatpush1.msra.mxu0 0.0
      %544 = vmatprep.subr.mxu0 0.0
      %545 = vmatpush1.msra.mxu0 0.0
      %546 = vmatprep.subr.mxu0 0.0
      %547 = vmatpush1.msra.mxu0 0.0
      %548 = vmatprep.subr.mxu0 0.0
      %549 = vmatpush1.msra.mxu0 0.0
      %550 = vmatprep.subr.mxu0 0.0
      %551 = vmatpush1.msra.mxu0 0.0
      %552 = vmatprep.subr.mxu0 0.0
      %553 = vmatpush1.msra.mxu0 0.0
      %554 = vmatprep.subr.mxu0 0.0
      %555 = vmatpush1.msra.mxu0 0.0
      %556 = vmatprep.subr.mxu0 0.0
      %557 = vmatpush1.msra.mxu0 0.0
      %558 = vmatprep.subr.mxu0 0.0
      %559 = vmatpush1.msra.mxu0 0.0
      %560 = vmatprep.subr.mxu0 0.0
      %561 = vmatpush1.msra.mxu0 0.0
      %562 = vmatprep.subr.mxu0 0.0
      %563 = vmatpush1.msra.mxu0 0.0
      %564 = vmatprep.subr.mxu0 0.0
      %565 = vmatpush1.msra.mxu0 0.0
      %566 = vmatprep.subr.mxu0 0.0
      %567 = vmatpush1.msra.mxu0 0.0
      %568 = vmatprep.subr.mxu0 0.0
      %569 = vmatpush1.msra.mxu0 0.0
      %570 = vmatprep.subr.mxu0 0.0
      %571 = vmatpush1.msra.mxu0 0.0
      %572 = vmatprep.subr.mxu0 0.0
      %573 = vmatpush1.msra.mxu0 0.0
      %574 = vmatprep.subr.mxu0 0.0
      %575 = vmatpush1.msra.mxu0 0.0
      %576 = vmatprep.subr.mxu0 0.0
      %577 = vmatpush1.msra.mxu0 0.0
      %578 = vmatprep.mubr.f32.mxu0 0.0
      %579 = vmatmul.mubr.f32.gmra.mrb[0].mxu0 %v503
      %v580 = vpop.f32.mrb[0].mxu0
      %v581 = vadd.f32 0.0, %v580
      %v582 = vpop.f32.mrb[0].mxu0
      %583 = vmatprep.mubr.f32.mxu0 0.0
      %584 = vmatmul.mubr.f32.gmra.mrb[0].mxu0 %v506
      %v585 = vpop.f32.mrb[0].mxu0
      %v586 = vadd.f32 0.0, %v585
      %v587 = vpop.f32.mrb[0].mxu0
      %588 = vmatprep.mubr.f32.mxu0 0.0
      %589 = vmatmul.mubr.f32.gmra.mrb[0].mxu0 %v509
      %v590 = vpop.f32.mrb[0].mxu0
      %v591 = vadd.f32 0.0, %v590
      %v592 = vpop.f32.mrb[0].mxu0
      %593 = vmatprep.mubr.f32.mxu0 0.0
      %594 = vmatmul.mubr.f32.gmra.mrb[0].mxu0 %v512
      %v595 = vpop.f32.mrb[0].mxu0
      %v596 = vadd.f32 0.0, %v595
      %v597 = vpop.f32.mrb[0].mxu0
      %598 = vdwg.mxu0
      %s599 = scalar_lea.vmem %s2, 96
      %v600 = vld [vmem:[%s599] sm:$0xff]
      %v601 = vld [vmem:[%s599 + $0x8] sm:$0xff]
      %v602 = vld [vmem:[%s599 + $0x10] sm:$0xff]
      %v603 = vld [vmem:[%s599 + $0x18] sm:$0xff]
      %v605 = vsel %vm297, %v600, 0
      %v608 = vsel %vm297, %v601, 0
      %v611 = vsel %vm297, %v602, 0
      %v614 = vsel %vm297, %v603, 0
      %616 = vmatprep.subr.mxu0 0.0
      %617 = vmatpush1.msra.mxu0 %v269
      %618 = vmatprep.subr.mxu0 0.0
      %619 = vmatpush1.msra.mxu0 %v275
      %620 = vmatprep.subr.mxu0 0.0
      %621 = vmatpush1.msra.mxu0 %v278
      %622 = vmatprep.subr.mxu0 0.0
      %623 = vmatpush1.msra.mxu0 %v281
      %624 = vmatprep.subr.mxu0 0.0
      %625 = vmatpush1.msra.mxu0 %v271
      %626 = vmatprep.subr.mxu0 0.0
      %627 = vmatpush1.msra.mxu0 %v285
      %628 = vmatprep.subr.mxu0 0.0
      %629 = vmatpush1.msra.mxu0 %v288
      %630 = vmatprep.subr.mxu0 0.0
      %631 = vmatpush1.msra.mxu0 %v291
      %632 = vmatprep.subr.mxu0 0.0
      %633 = vmatpush1.msra.mxu0 0.0
      %634 = vmatprep.subr.mxu0 0.0
      %635 = vmatpush1.msra.mxu0 0.0
      %636 = vmatprep.subr.mxu0 0.0
      %637 = vmatpush1.msra.mxu0 0.0
      %638 = vmatprep.subr.mxu0 0.0
      %639 = vmatpush1.msra.mxu0 0.0
      %640 = vmatprep.subr.mxu0 0.0
      %641 = vmatpush1.msra.mxu0 0.0
      %642 = vmatprep.subr.mxu0 0.0
      %643 = vmatpush1.msra.mxu0 0.0
      %644 = vmatprep.subr.mxu0 0.0
      %645 = vmatpush1.msra.mxu0 0.0
      %646 = vmatprep.subr.mxu0 0.0
      %647 = vmatpush1.msra.mxu0 0.0
      %648 = vmatprep.subr.mxu0 0.0
      %649 = vmatpush1.msra.mxu0 0.0
      %650 = vmatprep.subr.mxu0 0.0
      %651 = vmatpush1.msra.mxu0 0.0
      %652 = vmatprep.subr.mxu0 0.0
      %653 = vmatpush1.msra.mxu0 0.0
      %654 = vmatprep.subr.mxu0 0.0
      %655 = vmatpush1.msra.mxu0 0.0
      %656 = vmatprep.subr.mxu0 0.0
      %657 = vmatpush1.msra.mxu0 0.0
      %658 = vmatprep.subr.mxu0 0.0
      %659 = vmatpush1.msra.mxu0 0.0
      %660 = vmatprep.subr.mxu0 0.0
      %661 = vmatpush1.msra.mxu0 0.0
      %662 = vmatprep.subr.mxu0 0.0
      %663 = vmatpush1.msra.mxu0 0.0
      %664 = vmatprep.subr.mxu0 0.0
      %665 = vmatpush1.msra.mxu0 0.0
      %666 = vmatprep.subr.mxu0 0.0
      %667 = vmatpush1.msra.mxu0 0.0
      %668 = vmatprep.subr.mxu0 0.0
      %669 = vmatpush1.msra.mxu0 0.0
      %670 = vmatprep.subr.mxu0 0.0
      %671 = vmatpush1.msra.mxu0 0.0
      %672 = vmatprep.subr.mxu0 0.0
      %673 = vmatpush1.msra.mxu0 0.0
      %674 = vmatprep.subr.mxu0 0.0
      %675 = vmatpush1.msra.mxu0 0.0
      %676 = vmatprep.subr.mxu0 0.0
      %677 = vmatpush1.msra.mxu0 0.0
      %678 = vmatprep.subr.mxu0 0.0
      %679 = vmatpush1.msra.mxu0 0.0
      %680 = vmatprep.mubr.f32.mxu0 0.0
      %681 = vmatmul.mubr.f32.gmra.mrb[0].mxu0 %v605
      %v682 = vpop.f32.mrb[0].mxu0
      %v683 = vadd.f32 0.0, %v682
      %v684 = vpop.f32.mrb[0].mxu0
      %685 = vmatprep.mubr.f32.mxu0 0.0
      %686 = vmatmul.mubr.f32.gmra.mrb[0].mxu0 %v608
      %v687 = vpop.f32.mrb[0].mxu0
      %v688 = vadd.f32 0.0, %v687
      %v689 = vpop.f32.mrb[0].mxu0
      %690 = vmatprep.mubr.f32.mxu0 0.0
      %691 = vmatmul.mubr.f32.gmra.mrb[0].mxu0 %v611
      %v692 = vpop.f32.mrb[0].mxu0
      %v693 = vadd.f32 0.0, %v692
      %v694 = vpop.f32.mrb[0].mxu0
      %695 = vmatprep.mubr.f32.mxu0 0.0
      %696 = vmatmul.mubr.f32.gmra.mrb[0].mxu0 %v614
      %v697 = vpop.f32.mrb[0].mxu0
      %v698 = vadd.f32 0.0, %v697
      %v699 = vpop.f32.mrb[0].mxu0
      %700 = vdwg.mxu0
      %705 = vrot.lane.b32.xlu0 %v479, 32
      %v706 = vpop.permute.xlu0 %705
      %707 = vrot.lane.b32.xlu0 %v484, 32
      %v708 = vpop.permute.xlu0 %707
      %709 = vrot.lane.b32.xlu0 %v489, 32
      %v710 = vpop.permute.xlu0 %709
      %711 = vrot.lane.b32.xlu0 %v494, 32
      %v712 = vpop.permute.xlu0 %711
      %721 = vrot.lane.b32.xlu0 %v581, 64
      %v722 = vpop.permute.xlu0 %721
      %723 = vrot.lane.b32.xlu0 %v586, 64
      %v724 = vpop.permute.xlu0 %723
      %725 = vrot.lane.b32.xlu0 %v591, 64
      %v726 = vpop.permute.xlu0 %725
      %727 = vrot.lane.b32.xlu0 %v596, 64
      %v728 = vpop.permute.xlu0 %727
      %737 = vrot.lane.b32.xlu0 %v683, 96
      %v738 = vpop.permute.xlu0 %737
      %739 = vrot.lane.b32.xlu0 %v688, 96
      %v740 = vpop.permute.xlu0 %739
      %741 = vrot.lane.b32.xlu0 %v693, 96
      %v742 = vpop.permute.xlu0 %741
      %743 = vrot.lane.b32.xlu0 %v698, 96
      %v744 = vpop.permute.xlu0 %743
      %vm749 = vcmask 261120
      %v750 = vsel %vm749, %v377, %v706
      %v751 = vsel %vm749, %v382, %v708
      %v752 = vsel %vm749, %v387, %v710
      %v753 = vsel %vm749, %v392, %v712
      %v754 = vsel %vm297, %v750, %v722
      %v755 = vsel %vm297, %v751, %v724
      %v756 = vsel %vm297, %v752, %v726
      %v757 = vsel %vm297, %v753, %v728
      %vm758 = vcmask 785408
      %v759 = vsel %vm758, %v754, %v738
      %v760 = vsel %vm758, %v755, %v740
      %v761 = vsel %vm758, %v756, %v742
      %v762 = vsel %vm758, %v757, %v744
      %763 = vst [vmem:[%s167] sm:$0xff] %v759
      %764 = vst [vmem:[%s167 + $0x8] sm:$0xff] %v760
      %765 = vst [vmem:[%s167 + $0x10] sm:$0xff] %v761
      %766 = vst [vmem:[%s167 + $0x18] sm:$0xff] %v762
      %s767 = smul.u32 4, %s14
      %p768 = scmp.lt.s32.totalorder %s767, 7
      %s769 = scalar_select %p768, %s767, 7
      %s770 = smul.addr %s769, 8
      %s771 = scalar_lea.vmem %s3, %s770
      // Predicated region
      $region33: #{interpolate.1} parent=31 // pred_check
        %p772 = pneg %p100
      $region34: #{interpolate.1} parent=31 // pred_check_branch
        %774 = sbr.rel (%p772) target = $region36
      $region35: #{interpolate.1} parent=31 // pred_region
        %s775 = smul.u32 4, %s14
      $region36: #{interpolate.1} parent=31 // pred_fallthru
        _
    $region32: #{interpolate.1} parent=5 // pred_fallthru
      _
    %p776 = scmp.le.s32.totalorder 2, %s9
    // Predicated region
    $region37: #{interpolate.1} parent=5 // pred_check
      %p777 = pneg %p776
    $region38: #{interpolate.1} parent=5 // pred_check_branch
      %779 = sbr.rel (%p777) target = $region40
    $region39: #{interpolate.1} parent=5 // pred_region
      %s780 = ssub.s32 %s9, 2
      // Predicated region
      $region41: #{interpolate.1} parent=39 // pred_check
        %p781 = pneg %p106
      $region42: #{interpolate.1} parent=39 // pred_check_branch
        %783 = sbr.rel (%p781) target = $region44
      $region43: #{interpolate.1} parent=39 // pred_region
        %s784 = smul.u32 4, %s15
        %p785 = scmp.lt.s32.totalorder %s784, 7
        %s786 = scalar_select %p785, %s784, 7
        %s787 = smul.addr %s786, 8
        %s788 = scalar_lea.vmem %s3, %s787
      $region44: #{interpolate.1} parent=39 // pred_fallthru
        _
    $region40: #{interpolate.1} parent=5 // pred_fallthru
      _
  $region6: #{interpolate.1} parent=0 // loop_footer
    %s13 = sadd.s32 1, %s9
  $region7: #{interpolate.1} parent=0 // loop_footer_branch
    %8 = sbr.rel target = $region3
  $region8: #{interpolate.1} parent=0 // loop_exit
    _

</llo_original>
